<compile_context>
chip_gen: v7x
topology: tpu7x:2x2x1
jax: 0.10.0
libtpu: 0.0.40
codegen_flags: <defaults>
</compile_context>

<pallas_src>
import functools
import math

import jax
import jax.numpy as jnp
from jax import lax
from jax.experimental import pallas as pl
from jax.experimental.pallas import tpu as pltpu


def _vmem_limit_bytes():
    """Explicit scoped-VMEM limit (the 16/32 MiB default is the real ceiling, not physical)."""
    try:
        cap = pltpu.get_tpu_info().vmem_capacity_bytes
        return int(min(cap * 3 // 4, 96 * 1024 * 1024))   # 96 MiB on v5e/v6e, 48 MiB on v7x
    except Exception:  # pragma: no cover - conservative fallback, safe on every generation
        return 48 * 1024 * 1024


def _choose_channel_block(BC, Ho, W, itemsize, block_budget_bytes):
    """Number of (H, W) channel planes processed per grid step."""
    sub = max(8, 32 // itemsize)                 # sublane tile of the input dtype
    plane_elems = 2 * Ho * W                     # = H * W elements per channel
    budget_elems = max(plane_elems, block_budget_bytes // 4)   # budget in f32-equiv elems
    cblk = max(1, min(BC, budget_elems // plane_elems))
    if BC >= 2:                                  # keep >= 2 grid steps so the "parallel"
        cblk = min(cblk, (BC + 1) // 2)          # axis can use both v7x TensorCores
    steps = -(-BC // cblk)
    if steps > 1 and steps % 2:                  # prefer an even step count (2 TCs)
        steps += 1
    cblk = -(-BC // steps)
    if Ho % 8 and 1 < cblk < BC:                 # per-channel store fallback: bound unroll
        cblk = min(cblk, 16)
    if cblk < BC and (cblk * Ho) % sub:          # (8,128) rule on the (cblk*Ho, 2W) block
        r = sub // math.gcd(Ho, sub)
        cblk = max(r, (cblk // r) * r)           # prefer rounding down (stays in budget)
        cblk = min(cblk, BC)
    return max(1, cblk)


def _wavelet_pool_kernel(x_ref, o_ref, *, wdim, ho, wo, cblk, aligned):
    f32 = jnp.float32

    # Haar column-pair operators, built in-kernel (tiny, grid-invariant, zero DMA).
    # The 0.5 conv scale is folded in.  rws: column-pair sums, rwd: left-minus-right diffs.
    rows = lax.broadcasted_iota(jnp.int32, (wdim, wo), 0)
    cols = lax.broadcasted_iota(jnp.int32, (wdim, wo), 1)
    even = rows == 2 * cols
    odd = rows == 2 * cols + 1
    rws = jnp.where(even | odd, 0.5, 0.0).astype(f32)                      # (W, Wo)
    rwd = jnp.where(even, 0.5, jnp.where(odd, -0.5, 0.0)).astype(f32)      # (W, Wo)

    # Input block is (cblk*Ho, 2W): row r = one output row of one channel; lanes [0:W]
    # hold the even (top) input row, lanes [W:2W] the odd (bottom) one.
    # Row pairing is pure VPU work (no H x H matmul).
    top = x_ref[:, pl.ds(0, wdim)].astype(f32)          # (cblk*Ho, W)
    bot = x_ref[:, pl.ds(wdim, wdim)].astype(f32)       # (cblk*Ho, W)
    rs = top + bot                                      # row-pair sums
    rd = top - bot                                      # row-pair diffs (top - bottom)

    # Column pairing on the MXU, all channels merged into the M dimension.
    # Separate sum/diff operators -> every component result starts at lane 0.
    ll = jnp.dot(rs, rws, preferred_element_type=f32)   # (cblk*Ho, Wo)
    lh = jnp.dot(rd, rws, preferred_element_type=f32)
    hl = jnp.dot(rs, rwd, preferred_element_type=f32)
    hh = jnp.dot(rd, rwd, preferred_element_type=f32)

    odt = o_ref.dtype
    comps = (ll, lh, hl, hh)
    if aligned:
        # (cblk*Ho, Wo) -> (cblk, Ho, Wo) is a free sublane regrouping
        # (Ho % 8 == 0, or cblk == 1 so it only adds a unit leading dim).
        for j, y in enumerate(comps):
            o_ref[:, j, :, :] = y.reshape(cblk, ho, wo).astype(odt)
    else:
        # Ho not sublane-aligned: store channel by channel with static slices only
        # (cblk is capped in the wrapper for this path, so the unroll stays small).
        for c in range(cblk):
            base = c * ho
            for j, y in enumerate(comps):
                o_ref[c, j, :, :] = y[base:base + ho, :].astype(odt)


def wavelet_pool(x):
    B, C, H, W = x.shape
    assert H % 2 == 0 and W % 2 == 0, "WaveletPool needs even H and W"
    Ho, Wo = H // 2, W // 2
    BC = B * C
    itemsize = jnp.dtype(x.dtype).itemsize

    vmem_limit = _vmem_limit_bytes()
    # ~1/8 of the scoped limit per block: 2x in + 2x out double buffers plus the f32
    # intermediates of the merged matmuls stay comfortably inside the limit.
    cblk = _choose_channel_block(BC, Ho, W, itemsize, vmem_limit // 8)
    grid = (pl.cdiv(BC, cblk),)
    aligned = (Ho % 8 == 0) or (cblk == 1)

    kern = functools.partial(
        _wavelet_pool_kernel, wdim=W, ho=Ho, wo=Wo, cblk=cblk, aligned=aligned)

    cost = pl.CostEstimate(
        flops=8 * BC * Ho * W * Wo,                 # four (M, W) @ (W, Wo) matmuls
        transcendentals=0,
        bytes_accessed=2 * BC * H * W * itemsize,   # read x once, write y once
    )

    # (B, C, H, W) -> (B*C*Ho, 2W): free reshape.  Row r holds input rows (2i, 2i+1) of
    # one channel side by side in lanes, so both Haar pairings need no strided access.
    xr = x.reshape(BC * Ho, 2 * W)

    y = pl.pallas_call(
        kern,
        out_shape=jax.ShapeDtypeStruct((BC, 4, Ho, Wo), x.dtype),
        grid=grid,
        in_specs=[pl.BlockSpec((cblk * Ho, 2 * W), lambda i: (i, 0))],
        out_specs=pl.BlockSpec((cblk, 4, Ho, Wo), lambda i: (i, 0, 0, 0)),
        compiler_params=pltpu.CompilerParams(
            dimension_semantics=("parallel",),
            vmem_limit_bytes=int(vmem_limit),
        ),
        cost_estimate=cost,
    )(xr)

    # (BC, 4, Ho, Wo) -> (B, 4C, Ho, Wo): contiguous (free) reshape; out channel = 4*c + j,
    # identical to PyTorch's groups=C ordering.
    return y.reshape(B, 4 * C, Ho, Wo)


def wavelet_pool_reference(x):
    """Pure-JAX reference mirroring the PyTorch module exactly.

    The PyTorch module stores the filters flipped ([::-1, ::-1]) and F.conv2d
    cross-correlates, exactly as lax.conv_general_dilated does here.
    """
    B, C, H, W = x.shape
    ll = jnp.array([[0.5, 0.5], [0.5, 0.5]], jnp.float32)
    lh = jnp.array([[-0.5, -0.5], [0.5, 0.5]], jnp.float32)
    hl = jnp.array([[-0.5, 0.5], [-0.5, 0.5]], jnp.float32)
    hh = jnp.array([[0.5, -0.5], [-0.5, 0.5]], jnp.float32)
    filts = jnp.stack([f[::-1, ::-1] for f in (ll, lh, hl, hh)], axis=0)[:, None]
    filters = jnp.concatenate([filts] * C, axis=0).astype(x.dtype)          # (4C, 1, 2, 2)
    return lax.conv_general_dilated(
        x, filters, window_strides=(2, 2), padding="VALID",
        dimension_numbers=("NCHW", "OIHW", "NCHW"), feature_group_count=C)


if __name__ == "__main__":
    key = jax.random.PRNGKey(0)
    B, C, H, W = 2, 4, 16, 16
    x = jax.random.normal(key, (B, C, H, W), dtype=jnp.float32)

    y = jax.block_until_ready(wavelet_pool(x))
    y_ref = wavelet_pool_reference(x)

    assert y.shape == (B, 4 * C, H // 2, W // 2), y.shape
    assert jnp.allclose(y, y_ref, atol=1e-5, rtol=1e-5), \
        ("mismatch vs reference conv", float(jnp.max(jnp.abs(y - y_ref))))
    print("KERNEL_OK")
</pallas_src>

<mosaic_0001>
module attributes {stable_mosaic.version = 11 : i64} {
  func.func @_wavelet_pool_kernel(%arg0: i32, %arg1: memref<32x32xf32, #tpu.memory_space<vmem>>, %arg2: memref<4x4x8x8xf32, #tpu.memory_space<vmem>>) attributes {dimension_semantics = [#tpu.dimension_semantics<parallel>], iteration_bounds = array<i64: 2>, scalar_prefetch = 0 : i64, scratch_operands = 0 : i64, tpu.core_type = #tpu.core_type<tc>, window_params = [{transform_indices = @transform_0, window_bounds = array<i64: 32, 32>}, {transform_indices = @transform_1, window_bounds = array<i64: 4, 4, 8, 8>}]} {
    %0 = tpu.iota {dimensions = array<i32: 0>} : vector<16x8xi32>
    %1 = tpu.iota {dimensions = array<i32: 1>} : vector<16x8xi32>
    %c2_i32 = arith.constant 2 : i32
    %2 = vector.broadcast %c2_i32 : i32 to vector<16x8xi32>
    %3 = arith.muli %2, %1 : vector<16x8xi32>
    %4 = arith.cmpi eq, %0, %3 : vector<16x8xi32>
    %c2_i32_0 = arith.constant 2 : i32
    %5 = vector.broadcast %c2_i32_0 : i32 to vector<16x8xi32>
    %6 = arith.muli %5, %1 : vector<16x8xi32>
    %c1_i32 = arith.constant 1 : i32
    %7 = vector.broadcast %c1_i32 : i32 to vector<16x8xi32>
    %8 = arith.addi %6, %7 : vector<16x8xi32>
    %9 = arith.cmpi eq, %0, %8 : vector<16x8xi32>
    %10 = arith.ori %4, %9 : vector<16x8xi1>
    %cst = arith.constant 5.000000e-01 : f32
    %cst_1 = arith.constant 0.000000e+00 : f32
    %11 = vector.broadcast %cst : f32 to vector<16x8xf32>
    %12 = vector.broadcast %cst_1 : f32 to vector<16x8xf32>
    %13 = arith.select %10, %11, %12 : vector<16x8xi1>, vector<16x8xf32>
    %cst_2 = arith.constant -5.000000e-01 : f32
    %cst_3 = arith.constant 0.000000e+00 : f32
    %14 = vector.broadcast %cst_2 : f32 to vector<16x8xf32>
    %15 = vector.broadcast %cst_3 : f32 to vector<16x8xf32>
    %16 = arith.select %9, %14, %15 : vector<16x8xi1>, vector<16x8xf32>
    %cst_4 = arith.constant 5.000000e-01 : f32
    %17 = vector.broadcast %cst_4 : f32 to vector<16x8xf32>
    %18 = arith.select %4, %17, %16 : vector<16x8xi1>, vector<16x8xf32>
    %c0 = arith.constant 0 : index
    %c0_5 = arith.constant 0 : index
    %19 = vector.load %arg1[%c0, %c0_5] : memref<32x32xf32, #tpu.memory_space<vmem>>, vector<32x16xf32>
    %c0_6 = arith.constant 0 : index
    %c16 = arith.constant 16 : index
    %20 = vector.load %arg1[%c0_6, %c16] : memref<32x32xf32, #tpu.memory_space<vmem>>, vector<32x16xf32>
    %21 = arith.addf %19, %20 : vector<32x16xf32>
    %22 = arith.subf %19, %20 : vector<32x16xf32>
    %cst_7 = arith.constant dense<0.000000e+00> : vector<32x8xf32>
    %23 = tpu.matmul %21, %13, %cst_7 {dimension_numbers = #tpu.dot_dimension_numbers<[1], [0], [0], [1], [0, 0, 1, 1], [], []>} : vector<32x16xf32>, vector<16x8xf32>, vector<32x8xf32> -> vector<32x8xf32>
    %cst_8 = arith.constant dense<0.000000e+00> : vector<32x8xf32>
    %24 = tpu.matmul %22, %13, %cst_8 {dimension_numbers = #tpu.dot_dimension_numbers<[1], [0], [0], [1], [0, 0, 1, 1], [], []>} : vector<32x16xf32>, vector<16x8xf32>, vector<32x8xf32> -> vector<32x8xf32>
    %cst_9 = arith.constant dense<0.000000e+00> : vector<32x8xf32>
    %25 = tpu.matmul %21, %18, %cst_9 {dimension_numbers = #tpu.dot_dimension_numbers<[1], [0], [0], [1], [0, 0, 1, 1], [], []>} : vector<32x16xf32>, vector<16x8xf32>, vector<32x8xf32> -> vector<32x8xf32>
    %cst_10 = arith.constant dense<0.000000e+00> : vector<32x8xf32>
    %26 = tpu.matmul %22, %18, %cst_10 {dimension_numbers = #tpu.dot_dimension_numbers<[1], [0], [0], [1], [0, 0, 1, 1], [], []>} : vector<32x16xf32>, vector<16x8xf32>, vector<32x8xf32> -> vector<32x8xf32>
    %27 = vector.shape_cast %23 : vector<32x8xf32> to vector<4x8x8xf32>
    %c0_11 = arith.constant 0 : index
    %c0_12 = arith.constant 0 : index
    %c0_13 = arith.constant 0 : index
    %c0_14 = arith.constant 0 : index
    %28 = vector.load %arg2[%c0_11, %c0_12, %c0_13, %c0_14] : memref<4x4x8x8xf32, #tpu.memory_space<vmem>>, vector<4x1x8x8xf32>
    %29 = vector.shape_cast %28 : vector<4x1x8x8xf32> to vector<4x8x8xf32>
    %30 = vector.shape_cast %27 : vector<4x8x8xf32> to vector<4x1x8x8xf32>
    tpu.vector_store %arg2[%c0_11, %c0_12, %c0_13, %c0_14], %30 {strides = array<i32>} : memref<4x4x8x8xf32, #tpu.memory_space<vmem>>, vector<4x1x8x8xf32>,
    %31 = vector.shape_cast %24 : vector<32x8xf32> to vector<4x8x8xf32>
    %c0_15 = arith.constant 0 : index
    %c1 = arith.constant 1 : index
    %c0_16 = arith.constant 0 : index
    %c0_17 = arith.constant 0 : index
    %32 = vector.load %arg2[%c0_15, %c1, %c0_16, %c0_17] : memref<4x4x8x8xf32, #tpu.memory_space<vmem>>, vector<4x1x8x8xf32>
    %33 = vector.shape_cast %32 : vector<4x1x8x8xf32> to vector<4x8x8xf32>
    %34 = vector.shape_cast %31 : vector<4x8x8xf32> to vector<4x1x8x8xf32>
    tpu.vector_store %arg2[%c0_15, %c1, %c0_16, %c0_17], %34 {strides = array<i32>} : memref<4x4x8x8xf32, #tpu.memory_space<vmem>>, vector<4x1x8x8xf32>,
    %35 = vector.shape_cast %25 : vector<32x8xf32> to vector<4x8x8xf32>
    %c0_18 = arith.constant 0 : index
    %c2 = arith.constant 2 : index
    %c0_19 = arith.constant 0 : index
    %c0_20 = arith.constant 0 : index
    %36 = vector.load %arg2[%c0_18, %c2, %c0_19, %c0_20] : memref<4x4x8x8xf32, #tpu.memory_space<vmem>>, vector<4x1x8x8xf32>
    %37 = vector.shape_cast %36 : vector<4x1x8x8xf32> to vector<4x8x8xf32>
    %38 = vector.shape_cast %35 : vector<4x8x8xf32> to vector<4x1x8x8xf32>
    tpu.vector_store %arg2[%c0_18, %c2, %c0_19, %c0_20], %38 {strides = array<i32>} : memref<4x4x8x8xf32, #tpu.memory_space<vmem>>, vector<4x1x8x8xf32>,
    %39 = vector.shape_cast %26 : vector<32x8xf32> to vector<4x8x8xf32>
    %c0_21 = arith.constant 0 : index
    %c3 = arith.constant 3 : index
    %c0_22 = arith.constant 0 : index
    %c0_23 = arith.constant 0 : index
    %40 = vector.load %arg2[%c0_21, %c3, %c0_22, %c0_23] : memref<4x4x8x8xf32, #tpu.memory_space<vmem>>, vector<4x1x8x8xf32>
    %41 = vector.shape_cast %40 : vector<4x1x8x8xf32> to vector<4x8x8xf32>
    %42 = vector.shape_cast %39 : vector<4x8x8xf32> to vector<4x1x8x8xf32>
    tpu.vector_store %arg2[%c0_21, %c3, %c0_22, %c0_23], %42 {strides = array<i32>} : memref<4x4x8x8xf32, #tpu.memory_space<vmem>>, vector<4x1x8x8xf32>,
    return
  }
  func.func @transform_0(%arg0: i32) -> (i32, i32) {
    %c0_i32 = arith.constant 0 : i32
    %c0_i32_0 = arith.constant 0 : i32
    return %arg0, %c0_i32 : i32, i32
  }
  func.func @transform_1(%arg0: i32) -> (i32, i32, i32, i32) {
    %c0_i32 = arith.constant 0 : i32
    %c0_i32_0 = arith.constant 0 : i32
    %c0_i32_1 = arith.constant 0 : i32
    %c0_i32_2 = arith.constant 0 : i32
    return %arg0, %c0_i32, %c0_i32_0, %c0_i32_1 : i32, i32, i32, i32
  }
}

</mosaic_0001>

<llo_original>
// kernel: tpu_custom_call.1
$region0: #{tpu_custom_call.1}
  #allocation0 [shape = 'u32[]', space=smem, size = 0x4, offset = 0x4, fixed_abs, tag = 'smem constant byte address 0x4 - core index']
  #allocation1 [shape = 'u32[144,128]{1,0:T(1,128)}', space=vmem, size = 0x12000, scoped, tag = 'internal scratch']
  %s0 = inlined_call_operand.vmem [shape: f32[64,32], index: 0, kind: input, shape index: {}]
  %s1 = inlined_call_operand.hbm [shape: f32[8,4,8,8], index: 1, kind: output, shape index: {}]
  %s2 = sld [smem:[#allocation0]]
  $region37: #{tpu_custom_call.1} parent=0
    _
  %s4 = ssub.s32 1, %s2
  %s5 = scalar_select 0, %s4, %s2
  $region1: #{tpu_custom_call.1} parent=0
    #allocation2 [shape = 'u8[131072]{0}', space=vmem, size = 0x20000, scoped, tag = 'output window, operand 0']
    #allocation3 [shape = 's32[2]{0}', space=sflag, size = 0x8, scoped, tag = 'scoped memory for tpu_custom_call.1']
    %6 = vsyncpa [#allocation3], 0
    %s7 = scalar_lea.sflag [#allocation3], 1
    %8 = vsyncpa %s7, 0
    loop: start=0, step=1, limit=4
    $region2: #{tpu_custom_call.1} parent=1 // loop_pre_header
      _
    $region3: #{tpu_custom_call.1} parent=1 // loop_header
      %s10 = sphi 0, %s14
      %p11 = scmp.ge.s32.totalorder %s10, 4
      %s20 = sphi 0, %s22
      %s23 = sphi 0, %s20
      %s24 = sphi 0, %s23
      %s40 = sphi 0, %s24
      %s46 = sphi 0, %s48
      %s49 = sphi 0, %s46
      %s50 = sphi 0, %s49
      %s66 = sphi 0, %s50
    $region4: #{tpu_custom_call.1} parent=1 // loop_header_branch
      %13 = sbr.rel (%p11) target = $region8
    $region5: #{tpu_custom_call.1} parent=1 // loop_body
      %s15 = ssub.s32 %s10, 1
      %s16 = ssub.s32 %s10, 2
      %s17 = sadd.s32 %s10, 1
      %s18 = ssub.s32 %s10, %s17
      %p19 = scmp.eq.s32.totalorder %s18, 0
      %s21 = sadd.s32 %s20, 1
      %s22 = scalar_select %p19, %s20, %s21
      %p25 = pneg %p19
      %p26 = scmp.eq.s32.totalorder %s10, 1
      %p27 = por %p25, %p26
      %p28 = scmp.ne.s32.totalorder %s20, %s23
      %p29 = scmp.eq.s32.totalorder %s10, 0
      %p30 = por %p28, %p29
      %p31 = scmp.ne.s32.totalorder %s20, %s23
      %p32 = scmp.eq.s32.totalorder %s15, 1
      %p33 = por %p31, %p32
      %p34 = scmp.ne.s32.totalorder %s23, %s24
      %p35 = scmp.eq.s32.totalorder %s15, 0
      %p36 = por %p34, %p35
      %p37 = scmp.ne.s32.totalorder %s23, %s24
      %p38 = scmp.eq.s32.totalorder %s16, 1
      %p39 = por %p37, %p38
      %p41 = scmp.ne.s32.totalorder %s24, %s40
      %p42 = scmp.eq.s32.totalorder %s16, 0
      %p43 = por %p41, %p42
      %s44 = ssub.s32 %s10, %s17
      %p45 = scmp.eq.s32.totalorder %s44, 0
      %s47 = sadd.s32 %s46, 1
      %s48 = scalar_select %p45, %s46, %s47
      %p51 = pneg %p45
      %p52 = scmp.eq.s32.totalorder %s10, 1
      %p53 = por %p51, %p52
      %p54 = scmp.ne.s32.totalorder %s46, %s49
      %p55 = scmp.eq.s32.totalorder %s10, 0
      %p56 = por %p54, %p55
      %p57 = scmp.ne.s32.totalorder %s46, %s49
      %p58 = scmp.eq.s32.totalorder %s15, 1
      %p59 = por %p57, %p58
      %p60 = scmp.ne.s32.totalorder %s49, %s50
      %p61 = scmp.eq.s32.totalorder %s15, 0
      %p62 = por %p60, %p61
      %p63 = scmp.ne.s32.totalorder %s49, %s50
      %p64 = scmp.eq.s32.totalorder %s16, 1
      %p65 = por %p63, %p64
      %p67 = scmp.ne.s32.totalorder %s50, %s66
      %p68 = scmp.eq.s32.totalorder %s16, 0
      %p69 = por %p67, %p68
      %p70 = scmp.le.s32.totalorder 1, %s10
      %p71 = scmp.lt.s32.totalorder %s10, 3
      %p72 = pnand %p70, %p71
      %p73 = pneg %p72
      // Predicated region
      $region9: #{tpu_custom_call.1} parent=5 // pred_check
        _
      $region10: #{tpu_custom_call.1} parent=5 // pred_check_branch
        %75 = sbr.rel (%p72) target = $region12
      $region11: #{tpu_custom_call.1} parent=5 // pred_region
        %s76 = ssub.s32 %s10, 1
      $region12: #{tpu_custom_call.1} parent=5 // pred_fallthru
        _
      %p77 = scmp.lt.s32.totalorder %s10, 2
      // Predicated region
      $region13: #{tpu_custom_call.1} parent=5 // pred_check
        %p78 = pneg %p77
      $region14: #{tpu_custom_call.1} parent=5 // pred_check_branch
        %80 = sbr.rel (%p78) target = $region16
      $region15: #{tpu_custom_call.1} parent=5 // pred_region
        // Predicated region
        $region17: #{tpu_custom_call.1} parent=15 // pred_check
          %p81 = pneg %p30
        $region18: #{tpu_custom_call.1} parent=15 // pred_check_branch
          %83 = sbr.rel (%p81) target = $region20
        $region19: #{tpu_custom_call.1} parent=15 // pred_region
          %s84 = smul.u32 4, %s10
          %p85 = scmp.lt.s32.totalorder %s84, 7
          %s86 = scalar_select %p85, %s84, 7
          %s87 = smul.addr %s86, 8
          %s88 = scalar_lea.vmem %s0, %s87
          %s89 = smul.u32 4, %s10
        $region20: #{tpu_custom_call.1} parent=15 // pred_fallthru
          _
      $region16: #{tpu_custom_call.1} parent=5 // pred_fallthru
        _
      %p90 = scmp.le.s32.totalorder 1, %s10
      %p91 = scmp.lt.s32.totalorder %s10, 3
      %p92 = pnand %p90, %p91
      %p93 = pneg %p92
      // Predicated region
      $region21: #{tpu_custom_call.1} parent=5 // pred_check
        _
      $region22: #{tpu_custom_call.1} parent=5 // pred_check_branch
        %95 = sbr.rel (%p92) target = $region24
      $region23: #{tpu_custom_call.1} parent=5 // pred_region
        %s96 = ssub.s32 %s10, 1
        %s97 = smul.u32 4, %s15
        %p98 = scmp.lt.s32.totalorder %s97, 7
        %s99 = scalar_select %p98, %s97, 7
        %s100 = smul.addr %s99, 8
        %s101 = scalar_lea.vmem %s0, %s100
        %p102 = pneg %p36
        %p103 = pneg %p33
        %p104 = pneg %p62
        %p105 = pneg %p59
        %s106 = sand.u32 %s49, 1
        %s107 = scalar_lea.sflag [#allocation3], %s106
        %s108 = sand.u32 %s49, 1
        %s109 = smul.addr %s108, 128
        %s110 = scalar_lea.vmem [#allocation2], %s109
        %s111 = smul.u32 4, %s15
        %p112 = scmp.lt.s32.totalorder %s111, 7
        %s113 = scalar_select %p112, %s111, 7
        %s114 = smul.addr %s113, 8
        %s115 = scalar_lea.vmem %s0, %s114
        %s116 = smul.u32 4, %s15
        %s117 = smul.u32 4, %s15
        %v118 = vlaneseq
        %v119 = vshrl.u32 %v118, 7
        %v120 = vadd.s32 %v119, 8
        %v121 = vlaneseq
        %v122 = vand.u32 %v121, 127
        %v123 = vmul.u32 %v122, 2
        %vm124 = vcmp.eq.s32.totalorder %v119, %v123
        %vm125 = vcmp.eq.s32.totalorder %v120, %v123
        %v126 = vadd.s32 %v123, 1
        %vm127 = vcmp.eq.s32.totalorder %v119, %v126
        %vm128 = vcmp.eq.s32.totalorder %v120, %v126
        %vm129 = vmor %vm124, %vm127
        %vm130 = vmor %vm125, %vm128
        %v131 = vsel %vm129, 0.5, 0.0
        %v132 = vsel %vm130, 0.5, 0.0
        %v133 = vsel %vm127, -0.5, 0.0
        %v134 = vsel %vm128, -0.5, 0.0
        %v135 = vsel %vm124, 0.5, %v133
        %v136 = vsel %vm125, 0.5, %v134
        %v137 = vld [vmem:[%s115] sm:$0xff]
        %v138 = vld [vmem:[%s115 + $0x8] sm:$0xff]
        %v139 = vld [vmem:[%s115 + $0x10] sm:$0xff]
        %v140 = vld [vmem:[%s115 + $0x18] sm:$0xff]
        %145 = vrot.lane.b32.xlu0 %v137, 112
        %v146 = vpop.permute.xlu0 %145
        %147 = vrot.lane.b32.xlu0 %v138, 112
        %v148 = vpop.permute.xlu0 %147
        %149 = vrot.lane.b32.xlu0 %v139, 112
        %v150 = vpop.permute.xlu0 %149
        %151 = vrot.lane.b32.xlu0 %v140, 112
        %v152 = vpop.permute.xlu0 %151
        %v157 = vadd.f32 %v137, %v146
        %v158 = vadd.f32 %v138, %v148
        %v159 = vadd.f32 %v139, %v150
        %v160 = vadd.f32 %v140, %v152
        %v161 = vsub.f32 %v137, %v146
        %v162 = vsub.f32 %v138, %v148
        %v163 = vsub.f32 %v139, %v150
        %v164 = vsub.f32 %v140, %v152
        %vm165 = vcmask 130048
        %v167 = vsel %vm165, %v157, 0
        %v170 = vsel %vm165, %v158, 0
        %v173 = vsel %vm165, %v159, 0
        %v176 = vsel %vm165, %v160, 0
        %178 = vmatprep.subr.mxu0 0.0
        %179 = vmatpush1.msra.mxu0 %v131
        %180 = vmatprep.subr.mxu0 0.0
        %181 = vmatpush1.msra.mxu0 %v132
        %182 = vmatprep.subr.mxu0 0.0
        %183 = vmatpush1.msra.mxu0 0.0
        %184 = vmatprep.subr.mxu0 0.0
        %185 = vmatpush1.msra.mxu0 0.0
        %186 = vmatprep.subr.mxu0 0.0
        %187 = vmatpush1.msra.mxu0 0.0
        %188 = vmatprep.subr.mxu0 0.0
        %189 = vmatpush1.msra.mxu0 0.0
        %190 = vmatprep.subr.mxu0 0.0
        %191 = vmatpush1.msra.mxu0 0.0
        %192 = vmatprep.subr.mxu0 0.0
        %193 = vmatpush1.msra.mxu0 0.0
        %194 = vmatprep.subr.mxu0 0.0
        %195 = vmatpush1.msra.mxu0 0.0
        %196 = vmatprep.subr.mxu0 0.0
        %197 = vmatpush1.msra.mxu0 0.0
        %198 = vmatprep.subr.mxu0 0.0
        %199 = vmatpush1.msra.mxu0 0.0
        %200 = vmatprep.subr.mxu0 0.0
        %201 = vmatpush1.msra.mxu0 0.0
        %202 = vmatprep.subr.mxu0 0.0
        %203 = vmatpush1.msra.mxu0 0.0
        %204 = vmatprep.subr.mxu0 0.0
        %205 = vmatpush1.msra.mxu0 0.0
        %206 = vmatprep.subr.mxu0 0.0
        %207 = vmatpush1.msra.mxu0 0.0
        %208 = vmatprep.subr.mxu0 0.0
        %209 = vmatpush1.msra.mxu0 0.0
        %210 = vmatprep.subr.mxu0 0.0
        %211 = vmatpush1.msra.mxu0 0.0
        %212 = vmatprep.subr.mxu0 0.0
        %213 = vmatpush1.msra.mxu0 0.0
        %214 = vmatprep.subr.mxu0 0.0
        %215 = vmatpush1.msra.mxu0 0.0
        %216 = vmatprep.subr.mxu0 0.0
        %217 = vmatpush1.msra.mxu0 0.0
        %218 = vmatprep.subr.mxu0 0.0
        %219 = vmatpush1.msra.mxu0 0.0
        %220 = vmatprep.subr.mxu0 0.0
        %221 = vmatpush1.msra.mxu0 0.0
        %222 = vmatprep.subr.mxu0 0.0
        %223 = vmatpush1.msra.mxu0 0.0
        %224 = vmatprep.subr.mxu0 0.0
        %225 = vmatpush1.msra.mxu0 0.0
        %226 = vmatprep.subr.mxu0 0.0
        %227 = vmatpush1.msra.mxu0 0.0
        %228 = vmatprep.subr.mxu0 0.0
        %229 = vmatpush1.msra.mxu0 0.0
        %230 = vmatprep.subr.mxu0 0.0
        %231 = vmatpush1.msra.mxu0 0.0
        %232 = vmatprep.subr.mxu0 0.0
        %233 = vmatpush1.msra.mxu0 0.0
        %234 = vmatprep.subr.mxu0 0.0
        %235 = vmatpush1.msra.mxu0 0.0
        %236 = vmatprep.subr.mxu0 0.0
        %237 = vmatpush1.msra.mxu0 0.0
        %238 = vmatprep.subr.mxu0 0.0
        %239 = vmatpush1.msra.mxu0 0.0
        %240 = vmatprep.subr.mxu0 0.0
        %241 = vmatpush1.msra.mxu0 0.0
        %242 = vmatprep.mubr.f32.mxu0 0.0
        %243 = vmatmul.mubr.f32.gmra.mrb[0].mxu0 %v167
        %v244 = vpop.f32.mrb[0].mxu0
        %v245 = vadd.f32 0.0, %v244
        %v246 = vpop.f32.mrb[0].mxu0
        %247 = vmatprep.mubr.f32.mxu0 0.0
        %248 = vmatmul.mubr.f32.gmra.mrb[0].mxu0 %v170
        %v249 = vpop.f32.mrb[0].mxu0
        %v250 = vadd.f32 0.0, %v249
        %v251 = vpop.f32.mrb[0].mxu0
        %252 = vmatprep.mubr.f32.mxu0 0.0
        %253 = vmatmul.mubr.f32.gmra.mrb[0].mxu0 %v173
        %v254 = vpop.f32.mrb[0].mxu0
        %v255 = vadd.f32 0.0, %v254
        %v256 = vpop.f32.mrb[0].mxu0
        %257 = vmatprep.mubr.f32.mxu0 0.0
        %258 = vmatmul.mubr.f32.gmra.mrb[0].mxu0 %v176
        %v259 = vpop.f32.mrb[0].mxu0
        %v260 = vadd.f32 0.0, %v259
        %v261 = vpop.f32.mrb[0].mxu0
        %262 = vdwg.mxu0
        %v264 = vsel %vm165, %v161, 0
        %v267 = vsel %vm165, %v162, 0
        %v270 = vsel %vm165, %v163, 0
        %v273 = vsel %vm165, %v164, 0
        %275 = vmatprep.subr.mxu0 0.0
        %276 = vmatpush1.msra.mxu0 %v131
        %277 = vmatprep.subr.mxu0 0.0
        %278 = vmatpush1.msra.mxu0 %v132
        %279 = vmatprep.subr.mxu0 0.0
        %280 = vmatpush1.msra.mxu0 0.0
        %281 = vmatprep.subr.mxu0 0.0
        %282 = vmatpush1.msra.mxu0 0.0
        %283 = vmatprep.subr.mxu0 0.0
        %284 = vmatpush1.msra.mxu0 0.0
        %285 = vmatprep.subr.mxu0 0.0
        %286 = vmatpush1.msra.mxu0 0.0
        %287 = vmatprep.subr.mxu0 0.0
        %288 = vmatpush1.msra.mxu0 0.0
        %289 = vmatprep.subr.mxu0 0.0
        %290 = vmatpush1.msra.mxu0 0.0
        %291 = vmatprep.subr.mxu0 0.0
        %292 = vmatpush1.msra.mxu0 0.0
        %293 = vmatprep.subr.mxu0 0.0
        %294 = vmatpush1.msra.mxu0 0.0
        %295 = vmatprep.subr.mxu0 0.0
        %296 = vmatpush1.msra.mxu0 0.0
        %297 = vmatprep.subr.mxu0 0.0
        %298 = vmatpush1.msra.mxu0 0.0
        %299 = vmatprep.subr.mxu0 0.0
        %300 = vmatpush1.msra.mxu0 0.0
        %301 = vmatprep.subr.mxu0 0.0
        %302 = vmatpush1.msra.mxu0 0.0
        %303 = vmatprep.subr.mxu0 0.0
        %304 = vmatpush1.msra.mxu0 0.0
        %305 = vmatprep.subr.mxu0 0.0
        %306 = vmatpush1.msra.mxu0 0.0
        %307 = vmatprep.subr.mxu0 0.0
        %308 = vmatpush1.msra.mxu0 0.0
        %309 = vmatprep.subr.mxu0 0.0
        %310 = vmatpush1.msra.mxu0 0.0
        %311 = vmatprep.subr.mxu0 0.0
        %312 = vmatpush1.msra.mxu0 0.0
        %313 = vmatprep.subr.mxu0 0.0
        %314 = vmatpush1.msra.mxu0 0.0
        %315 = vmatprep.subr.mxu0 0.0
        %316 = vmatpush1.msra.mxu0 0.0
        %317 = vmatprep.subr.mxu0 0.0
        %318 = vmatpush1.msra.mxu0 0.0
        %319 = vmatprep.subr.mxu0 0.0
        %320 = vmatpush1.msra.mxu0 0.0
        %321 = vmatprep.subr.mxu0 0.0
        %322 = vmatpush1.msra.mxu0 0.0
        %323 = vmatprep.subr.mxu0 0.0
        %324 = vmatpush1.msra.mxu0 0.0
        %325 = vmatprep.subr.mxu0 0.0
        %326 = vmatpush1.msra.mxu0 0.0
        %327 = vmatprep.subr.mxu0 0.0
        %328 = vmatpush1.msra.mxu0 0.0
        %329 = vmatprep.subr.mxu0 0.0
        %330 = vmatpush1.msra.mxu0 0.0
        %331 = vmatprep.subr.mxu0 0.0
        %332 = vmatpush1.msra.mxu0 0.0
        %333 = vmatprep.subr.mxu0 0.0
        %334 = vmatpush1.msra.mxu0 0.0
        %335 = vmatprep.subr.mxu0 0.0
        %336 = vmatpush1.msra.mxu0 0.0
        %337 = vmatprep.subr.mxu0 0.0
        %338 = vmatpush1.msra.mxu0 0.0
        %339 = vmatprep.mubr.f32.mxu0 0.0
        %340 = vmatmul.mubr.f32.gmra.mrb[0].mxu0 %v264
        %v341 = vpop.f32.mrb[0].mxu0
        %v342 = vadd.f32 0.0, %v341
        %v343 = vpop.f32.mrb[0].mxu0
        %344 = vmatprep.mubr.f32.mxu0 0.0
        %345 = vmatmul.mubr.f32.gmra.mrb[0].mxu0 %v267
        %v346 = vpop.f32.mrb[0].mxu0
        %v347 = vadd.f32 0.0, %v346
        %v348 = vpop.f32.mrb[0].mxu0
        %349 = vmatprep.mubr.f32.mxu0 0.0
        %350 = vmatmul.mubr.f32.gmra.mrb[0].mxu0 %v270
        %v351 = vpop.f32.mrb[0].mxu0
        %v352 = vadd.f32 0.0, %v351
        %v353 = vpop.f32.mrb[0].mxu0
        %354 = vmatprep.mubr.f32.mxu0 0.0
        %355 = vmatmul.mubr.f32.gmra.mrb[0].mxu0 %v273
        %v356 = vpop.f32.mrb[0].mxu0
        %v357 = vadd.f32 0.0, %v356
        %v358 = vpop.f32.mrb[0].mxu0
        %359 = vdwg.mxu0
        %360 = vmatprep.subr.mxu0 0.0
        %361 = vmatpush1.msra.mxu0 %v135
        %362 = vmatprep.subr.mxu0 0.0
        %363 = vmatpush1.msra.mxu0 %v136
        %364 = vmatprep.subr.mxu0 0.0
        %365 = vmatpush1.msra.mxu0 0.0
        %366 = vmatprep.subr.mxu0 0.0
        %367 = vmatpush1.msra.mxu0 0.0
        %368 = vmatprep.subr.mxu0 0.0
        %369 = vmatpush1.msra.mxu0 0.0
        %370 = vmatprep.subr.mxu0 0.0
        %371 = vmatpush1.msra.mxu0 0.0
        %372 = vmatprep.subr.mxu0 0.0
        %373 = vmatpush1.msra.mxu0 0.0
        %374 = vmatprep.subr.mxu0 0.0
        %375 = vmatpush1.msra.mxu0 0.0
        %376 = vmatprep.subr.mxu0 0.0
        %377 = vmatpush1.msra.mxu0 0.0
        %378 = vmatprep.subr.mxu0 0.0
        %379 = vmatpush1.msra.mxu0 0.0
        %380 = vmatprep.subr.mxu0 0.0
        %381 = vmatpush1.msra.mxu0 0.0
        %382 = vmatprep.subr.mxu0 0.0
        %383 = vmatpush1.msra.mxu0 0.0
        %384 = vmatprep.subr.mxu0 0.0
        %385 = vmatpush1.msra.mxu0 0.0
        %386 = vmatprep.subr.mxu0 0.0
        %387 = vmatpush1.msra.mxu0 0.0
        %388 = vmatprep.subr.mxu0 0.0
        %389 = vmatpush1.msra.mxu0 0.0
        %390 = vmatprep.subr.mxu0 0.0
        %391 = vmatpush1.msra.mxu0 0.0
        %392 = vmatprep.subr.mxu0 0.0
        %393 = vmatpush1.msra.mxu0 0.0
        %394 = vmatprep.subr.mxu0 0.0
        %395 = vmatpush1.msra.mxu0 0.0
        %396 = vmatprep.subr.mxu0 0.0
        %397 = vmatpush1.msra.mxu0 0.0
        %398 = vmatprep.subr.mxu0 0.0
        %399 = vmatpush1.msra.mxu0 0.0
        %400 = vmatprep.subr.mxu0 0.0
        %401 = vmatpush1.msra.mxu0 0.0
        %402 = vmatprep.subr.mxu0 0.0
        %403 = vmatpush1.msra.mxu0 0.0
        %404 = vmatprep.subr.mxu0 0.0
        %405 = vmatpush1.msra.mxu0 0.0
        %406 = vmatprep.subr.mxu0 0.0
        %407 = vmatpush1.msra.mxu0 0.0
        %408 = vmatprep.subr.mxu0 0.0
        %409 = vmatpush1.msra.mxu0 0.0
        %410 = vmatprep.subr.mxu0 0.0
        %411 = vmatpush1.msra.mxu0 0.0
        %412 = vmatprep.subr.mxu0 0.0
        %413 = vmatpush1.msra.mxu0 0.0
        %414 = vmatprep.subr.mxu0 0.0
        %415 = vmatpush1.msra.mxu0 0.0
        %416 = vmatprep.subr.mxu0 0.0
        %417 = vmatpush1.msra.mxu0 0.0
        %418 = vmatprep.subr.mxu0 0.0
        %419 = vmatpush1.msra.mxu0 0.0
        %420 = vmatprep.subr.mxu0 0.0
        %421 = vmatpush1.msra.mxu0 0.0
        %422 = vmatprep.subr.mxu0 0.0
        %423 = vmatpush1.msra.mxu0 0.0
        %424 = vmatprep.mubr.f32.mxu0 0.0
        %425 = vmatmul.mubr.f32.gmra.mrb[0].mxu0 %v167
        %v426 = vpop.f32.mrb[0].mxu0
        %v427 = vadd.f32 0.0, %v426
        %v428 = vpop.f32.mrb[0].mxu0
        %429 = vmatprep.mubr.f32.mxu0 0.0
        %430 = vmatmul.mubr.f32.gmra.mrb[0].mxu0 %v170
        %v431 = vpop.f32.mrb[0].mxu0
        %v432 = vadd.f32 0.0, %v431
        %v433 = vpop.f32.mrb[0].mxu0
        %434 = vmatprep.mubr.f32.mxu0 0.0
        %435 = vmatmul.mubr.f32.gmra.mrb[0].mxu0 %v173
        %v436 = vpop.f32.mrb[0].mxu0
        %v437 = vadd.f32 0.0, %v436
        %v438 = vpop.f32.mrb[0].mxu0
        %439 = vmatprep.mubr.f32.mxu0 0.0
        %440 = vmatmul.mubr.f32.gmra.mrb[0].mxu0 %v176
        %v441 = vpop.f32.mrb[0].mxu0
        %v442 = vadd.f32 0.0, %v441
        %v443 = vpop.f32.mrb[0].mxu0
        %444 = vdwg.mxu0
        %445 = vmatprep.subr.mxu0 0.0
        %446 = vmatpush1.msra.mxu0 %v135
        %447 = vmatprep.subr.mxu0 0.0
        %448 = vmatpush1.msra.mxu0 %v136
        %449 = vmatprep.subr.mxu0 0.0
        %450 = vmatpush1.msra.mxu0 0.0
        %451 = vmatprep.subr.mxu0 0.0
        %452 = vmatpush1.msra.mxu0 0.0
        %453 = vmatprep.subr.mxu0 0.0
        %454 = vmatpush1.msra.mxu0 0.0
        %455 = vmatprep.subr.mxu0 0.0
        %456 = vmatpush1.msra.mxu0 0.0
        %457 = vmatprep.subr.mxu0 0.0
        %458 = vmatpush1.msra.mxu0 0.0
        %459 = vmatprep.subr.mxu0 0.0
        %460 = vmatpush1.msra.mxu0 0.0
        %461 = vmatprep.subr.mxu0 0.0
        %462 = vmatpush1.msra.mxu0 0.0
        %463 = vmatprep.subr.mxu0 0.0
        %464 = vmatpush1.msra.mxu0 0.0
        %465 = vmatprep.subr.mxu0 0.0
        %466 = vmatpush1.msra.mxu0 0.0
        %467 = vmatprep.subr.mxu0 0.0
        %468 = vmatpush1.msra.mxu0 0.0
        %469 = vmatprep.subr.mxu0 0.0
        %470 = vmatpush1.msra.mxu0 0.0
        %471 = vmatprep.subr.mxu0 0.0
        %472 = vmatpush1.msra.mxu0 0.0
        %473 = vmatprep.subr.mxu0 0.0
        %474 = vmatpush1.msra.mxu0 0.0
        %475 = vmatprep.subr.mxu0 0.0
        %476 = vmatpush1.msra.mxu0 0.0
        %477 = vmatprep.subr.mxu0 0.0
        %478 = vmatpush1.msra.mxu0 0.0
        %479 = vmatprep.subr.mxu0 0.0
        %480 = vmatpush1.msra.mxu0 0.0
        %481 = vmatprep.subr.mxu0 0.0
        %482 = vmatpush1.msra.mxu0 0.0
        %483 = vmatprep.subr.mxu0 0.0
        %484 = vmatpush1.msra.mxu0 0.0
        %485 = vmatprep.subr.mxu0 0.0
        %486 = vmatpush1.msra.mxu0 0.0
        %487 = vmatprep.subr.mxu0 0.0
        %488 = vmatpush1.msra.mxu0 0.0
        %489 = vmatprep.subr.mxu0 0.0
        %490 = vmatpush1.msra.mxu0 0.0
        %491 = vmatprep.subr.mxu0 0.0
        %492 = vmatpush1.msra.mxu0 0.0
        %493 = vmatprep.subr.mxu0 0.0
        %494 = vmatpush1.msra.mxu0 0.0
        %495 = vmatprep.subr.mxu0 0.0
        %496 = vmatpush1.msra.mxu0 0.0
        %497 = vmatprep.subr.mxu0 0.0
        %498 = vmatpush1.msra.mxu0 0.0
        %499 = vmatprep.subr.mxu0 0.0
        %500 = vmatpush1.msra.mxu0 0.0
        %501 = vmatprep.subr.mxu0 0.0
        %502 = vmatpush1.msra.mxu0 0.0
        %503 = vmatprep.subr.mxu0 0.0
        %504 = vmatpush1.msra.mxu0 0.0
        %505 = vmatprep.subr.mxu0 0.0
        %506 = vmatpush1.msra.mxu0 0.0
        %507 = vmatprep.subr.mxu0 0.0
        %508 = vmatpush1.msra.mxu0 0.0
        %509 = vmatprep.mubr.f32.mxu0 0.0
        %510 = vmatmul.mubr.f32.gmra.mrb[0].mxu0 %v264
        %v511 = vpop.f32.mrb[0].mxu0
        %v512 = vadd.f32 0.0, %v511
        %v513 = vpop.f32.mrb[0].mxu0
        %514 = vmatprep.mubr.f32.mxu0 0.0
        %515 = vmatmul.mubr.f32.gmra.mrb[0].mxu0 %v267
        %v516 = vpop.f32.mrb[0].mxu0
        %v517 = vadd.f32 0.0, %v516
        %v518 = vpop.f32.mrb[0].mxu0
        %519 = vmatprep.mubr.f32.mxu0 0.0
        %520 = vmatmul.mubr.f32.gmra.mrb[0].mxu0 %v270
        %v521 = vpop.f32.mrb[0].mxu0
        %v522 = vadd.f32 0.0, %v521
        %v523 = vpop.f32.mrb[0].mxu0
        %524 = vmatprep.mubr.f32.mxu0 0.0
        %525 = vmatmul.mubr.f32.gmra.mrb[0].mxu0 %v273
        %v526 = vpop.f32.mrb[0].mxu0
        %v527 = vadd.f32 0.0, %v526
        %v528 = vpop.f32.mrb[0].mxu0
        %529 = vdwg.mxu0
        %vm530 = vcmask 64512
        %531 = vst.msk [vmem:[%s110] sm:$0xff] %vm530, %v245
        %532 = vst.msk [vmem:[%s110 + $0x20] sm:$0xff] %vm530, %v250
        %533 = vst.msk [vmem:[%s110 + $0x40] sm:$0xff] %vm530, %v255
        %534 = vst.msk [vmem:[%s110 + $0x60] sm:$0xff] %vm530, %v260
        %s535 = scalar_lea.vmem %s110, 8 [#allocation2]
        %536 = vst.msk [vmem:[%s535] sm:$0xff] %vm530, %v342
        %537 = vst.msk [vmem:[%s535 + $0x20] sm:$0xff] %vm530, %v347
        %538 = vst.msk [vmem:[%s535 + $0x40] sm:$0xff] %vm530, %v352
        %539 = vst.msk [vmem:[%s535 + $0x60] sm:$0xff] %vm530, %v357
        %s540 = scalar_lea.vmem %s110, 16 [#allocation2]
        %541 = vst.msk [vmem:[%s540] sm:$0xff] %vm530, %v427
        %542 = vst.msk [vmem:[%s540 + $0x20] sm:$0xff] %vm530, %v432
        %543 = vst.msk [vmem:[%s540 + $0x40] sm:$0xff] %vm530, %v437
        %544 = vst.msk [vmem:[%s540 + $0x60] sm:$0xff] %vm530, %v442
        %s545 = scalar_lea.vmem %s110, 24 [#allocation2]
        %546 = vst.msk [vmem:[%s545] sm:$0xff] %vm530, %v512
        %547 = vst.msk [vmem:[%s545 + $0x20] sm:$0xff] %vm530, %v517
        %548 = vst.msk [vmem:[%s545 + $0x40] sm:$0xff] %vm530, %v522
        %549 = vst.msk [vmem:[%s545 + $0x60] sm:$0xff] %vm530, %v527
        %s550 = sand.u32 %s49, 1
        %s551 = scalar_lea.sflag [#allocation3], %s550
        %s552 = sand.u32 %s49, 1
        %s553 = smul.addr %s552, 128
        %s554 = scalar_lea.vmem [#allocation2], %s553
        // Predicated region
        $region25: #{tpu_custom_call.1} parent=23 // pred_check
          %p555 = pneg %p59
        $region26: #{tpu_custom_call.1} parent=23 // pred_check_branch
          %557 = sbr.rel (%p555) target = $region28
        $region27: #{tpu_custom_call.1} parent=23 // pred_region
          %s558 = smul.u32 4, %s15
          %s560 = ssub.s32 2048, 2048
          %561 = vsyncadd %s551, %s560
          %s562 = smul.addr %s558, 4
          %s563 = smul.addr %s562, 128
          %s564 = scalar_lea.hbm %s1, %s563
          %s565 = sshll.u32 %s554, 4
          %s566 = int_to_ptr.vmem [resolvable:$true] %s565
          %571 = dma.vmem_to_hbm [thread:$0]  %s566, 2048, %s564, %s551, 128, 128, 8
        $region28: #{tpu_custom_call.1} parent=23 // pred_fallthru
          _
      $region24: #{tpu_custom_call.1} parent=5 // pred_fallthru
        _
      %p572 = scmp.le.s32.totalorder 2, %s10
      // Predicated region
      $region29: #{tpu_custom_call.1} parent=5 // pred_check
        %p573 = pneg %p572
      $region30: #{tpu_custom_call.1} parent=5 // pred_check_branch
        %575 = sbr.rel (%p573) target = $region32
      $region31: #{tpu_custom_call.1} parent=5 // pred_region
        %s576 = ssub.s32 %s10, 2
        // Predicated region
        $region33: #{tpu_custom_call.1} parent=31 // pred_check
          %p577 = pneg %p65
        $region34: #{tpu_custom_call.1} parent=31 // pred_check_branch
          %579 = sbr.rel (%p577) target = $region36
        $region35: #{tpu_custom_call.1} parent=31 // pred_region
          %s580 = sand.u32 %s50, 1
          %s581 = scalar_lea.sflag [#allocation3], %s580
          %s582 = sand.u32 %s50, 1
          %s583 = smul.addr %s582, 128
          %s584 = scalar_lea.vmem [#allocation2], %s583
          %585 = dma.done %s581, 2048
        $region36: #{tpu_custom_call.1} parent=31 // pred_fallthru
          _
      $region32: #{tpu_custom_call.1} parent=5 // pred_fallthru
        _
    $region6: #{tpu_custom_call.1} parent=1 // loop_footer
      %s14 = sadd.s32 1, %s10
    $region7: #{tpu_custom_call.1} parent=1 // loop_footer_branch
      %9 = sbr.rel target = $region3
    $region8: #{tpu_custom_call.1} parent=1 // loop_exit
      _
    %586 = vsyncpa [#allocation3], 1
    %s587 = scalar_lea.sflag [#allocation3], 1
    %588 = vsyncpa %s587, 1

</llo_original>
